<compile_context>
chip_gen: v7x
topology: tpu7x:2x2x1
jax: 0.10.0
libtpu: 0.0.40
codegen_flags: <defaults>
</compile_context>

<pallas_src>
import functools

import jax
import jax.numpy as jnp
from jax import lax
from jax.experimental import pallas as pl
from jax.experimental.pallas import tpu as pltpu


def _round_up(x, m):
    return (x + m - 1) // m * m


def _vmem_capacity_bytes():
    """Physical VMEM per TensorCore; conservative (v7x) fallback if unknown."""
    try:
        info = pltpu.get_tpu_info()
        cap = getattr(info, "vmem_capacity_bytes", None)
        if cap:
            return int(cap)
    except Exception:
        pass
    return 64 * 1024 * 1024


# --------------------------------------------------------------------------
# One-time parameter prep (hoisted out of the per-call path).
# --------------------------------------------------------------------------
def prepare_linear_tanh_params(weight, bias=None):
    """weight: (out_ch, in_ch) PyTorch layout; bias: (out_ch,) or None.

    Returns (w_t, b2) with w_t: (in_ch, out_ch_p) and b2: (1, out_ch_p),
    out_ch_p = round_up(out_ch, 128), zero-padded columns. Call once at
    model-load time, NOT per forward call.
    """
    out_ch, in_ch = weight.shape
    out_ch_p = _round_up(out_ch, 128)
    w_t = jnp.transpose(weight)                              # (in_ch, out_ch)
    if out_ch_p != out_ch:
        w_t = jnp.pad(w_t, ((0, 0), (0, out_ch_p - out_ch)))
    if bias is None:
        b = jnp.zeros((out_ch_p,), weight.dtype)
    elif out_ch_p != out_ch:
        b = jnp.pad(bias, ((0, out_ch_p - out_ch),))
    else:
        b = bias
    return w_t, b.reshape(1, out_ch_p)


# --------------------------------------------------------------------------
# Kernels
# --------------------------------------------------------------------------
def _linear_tanh_kernel(x_ref, w_ref, b_ref, o_ref):
    # x_ref: (tm, in_ch), w_ref: (in_ch, tn), b_ref: (1, tn), o_ref: (tm, tn)
    acc = jnp.dot(x_ref[...], w_ref[...], preferred_element_type=jnp.float32)
    acc = acc + b_ref[...].astype(jnp.float32)        # bias broadcast over rows
    # tanh on f32 lowers to the EUP (free slot under an MXU-bound matmul).
    o_ref[...] = jnp.tanh(acc).astype(o_ref.dtype)


def _linear_tanh_k_kernel(x_ref, w_ref, b_ref, o_ref, acc_ref, *, rem, nk):
    # K-tiled variant: x_ref (tm, tk), w_ref (tk, tn), acc_ref (tm, tn) f32.
    k = pl.program_id(2)

    @pl.when(k == 0)
    def _():
        acc_ref[...] = jnp.zeros_like(acc_ref)

    x = x_ref[...]
    w = w_ref[...]
    if rem:  # static: ragged last K block -> zero OOB cols of x / rows of W
        tk = x.shape[1]
        limit = jnp.where(k == nk - 1, rem, tk)
        col = lax.broadcasted_iota(jnp.int32, x.shape, 1)
        row = lax.broadcasted_iota(jnp.int32, w.shape, 0)
        x = jnp.where(col < limit, x, jnp.zeros_like(x))
        w = jnp.where(row < limit, w, jnp.zeros_like(w))

    acc_ref[...] += jnp.dot(x, w, preferred_element_type=jnp.float32)

    @pl.when(k == nk - 1)
    def _():
        out = acc_ref[...] + b_ref[...].astype(jnp.float32)
        o_ref[...] = jnp.tanh(out).astype(o_ref.dtype)


# --------------------------------------------------------------------------
# Tile / grid planning (trace-time Python ints only)
# --------------------------------------------------------------------------
def _plan_tiles(n, in_ch, out_ch_p, itemsize):
    cap = _vmem_capacity_bytes()
    budget = int(cap * 0.55)          # ~70 MiB on v5e/v6e, ~35 MiB on v7x

    def need(tm, tn, tk, with_acc):
        # 2x: Pallas double-buffers every BlockSpec operand (x, W, bias, out).
        buf = 2 * itemsize * (tm * tk + tk * tn + tn + tm * tn)
        # f32 epilogue temps (dot result / tanh temp) + optional f32 accumulator.
        buf += (3 if with_acc else 2) * 4 * tm * tn
        return buf

    # ---- plan A: full in_ch per tile (no K axis) -------------------------
    tm_cap = 1024 if budget >= 48 * 2**20 else 512
    tm = min(tm_cap, _round_up(max(n, 1), 8))
    tn = min(out_ch_p, 2048)
    while need(tm, tn, in_ch, False) > budget and tn > 128:
        tn = max(128, (tn // 2 // 128) * 128)
    while need(tm, tn, in_ch, False) > budget and tm > 128:
        tm = max(128, _round_up(tm // 2, 8))

    if need(tm, tn, in_ch, False) <= budget:
        # Keep both v7x TensorCores busy: avoid a 1x1 grid when splittable.
        if pl.cdiv(n, tm) * pl.cdiv(out_ch_p, tn) == 1:
            if out_ch_p >= 256:
                tn = _round_up(out_ch_p // 2, 128)
            elif n >= 16:
                tm = _round_up(pl.cdiv(n, 2), 8)
        return dict(use_k=False, tm=tm, tn=tn, tk=in_ch,
                    need=need(tm, tn, in_ch, False))

    # ---- plan B: K-tiled reduction (very large in_ch) --------------------
    tm = min(512, _round_up(max(n, 1), 8))
    tn = min(out_ch_p, 512)
    tk = min(2048, _round_up(in_ch, 128))
    while need(tm, tn, tk, True) > budget and tk > 512:
        tk = max(512, (tk // 2 // 128) * 128)
    while need(tm, tn, tk, True) > budget and tn > 128:
        tn = max(128, (tn // 2 // 128) * 128)
    while need(tm, tn, tk, True) > budget and tm > 128:
        tm = max(128, _round_up(tm // 2, 8))
    return dict(use_k=True, tm=tm, tn=tn, tk=tk, need=need(tm, tn, tk, True))


# --------------------------------------------------------------------------
# Forward
# --------------------------------------------------------------------------
@functools.partial(jax.jit, static_argnames=("in_ch", "out_ch"))
def linear_tanh(x, w_t, b2, *, in_ch, out_ch):
    """Linear_Tanh.forward.

    x   : any shape whose flattened size is a multiple of in_ch
    w_t : (in_ch, out_ch_p)  pre-transposed / padded weight (see prep fn)
    b2  : (1, out_ch_p)      padded bias
    returns (N, out_ch) with N = x.size // in_ch
    """
    x2 = x.reshape(-1, in_ch)
    n = x2.shape[0]
    out_ch_p = w_t.shape[1]
    itemsize = max(jnp.dtype(x2.dtype).itemsize, jnp.dtype(w_t.dtype).itemsize)

    plan = _plan_tiles(n, in_ch, out_ch_p, itemsize)
    tm, tn, tk = plan["tm"], plan["tn"], plan["tk"]
    ni, nj = pl.cdiv(n, tm), pl.cdiv(out_ch_p, tn)

    cap = _vmem_capacity_bytes()
    vmem_limit = int(min(int(cap * 0.85),
                         max(16 * 2**20, int(1.3 * plan["need"]) + (4 << 20))))
    out_shape = jax.ShapeDtypeStruct((n, out_ch), x2.dtype)

    if not plan["use_k"]:
        # Choose grid order so the operand that would be re-streamed from HBM
        # is the smaller one (W resident for small-batch, x resident otherwise).
        traffic_rows_outer = n * in_ch + ni * out_ch_p * in_ch
        traffic_cols_outer = out_ch_p * in_ch + nj * n * in_ch
        if traffic_rows_outer <= traffic_cols_outer:
            grid = (ni, nj)
            x_map = lambda i, j: (i, 0)
            w_map = lambda i, j: (0, j)
            b_map = lambda i, j: (0, j)
            o_map = lambda i, j: (i, j)
        else:
            grid = (nj, ni)
            x_map = lambda j, i: (i, 0)
            w_map = lambda j, i: (0, j)
            b_map = lambda j, i: (0, j)
            o_map = lambda j, i: (i, j)

        return pl.pallas_call(
            _linear_tanh_kernel,
            out_shape=out_shape,
            grid_spec=pltpu.PrefetchScalarGridSpec(
                num_scalar_prefetch=0,
                grid=grid,
                in_specs=[
                    pl.BlockSpec((tm, in_ch), x_map),
                    pl.BlockSpec((in_ch, tn), w_map),
                    pl.BlockSpec((1, tn), b_map),
                ],
                out_specs=pl.BlockSpec((tm, tn), o_map),
            ),
            compiler_params=pltpu.CompilerParams(
                dimension_semantics=("parallel", "parallel"),
                vmem_limit_bytes=vmem_limit,
            ),
        )(x2, w_t, b2)

    # K-tiled path (very large in_ch): reduction axis last, f32 accumulator.
    nk = pl.cdiv(in_ch, tk)
    rem = in_ch % tk if in_ch % tk != 0 else 0
    kernel = functools.partial(_linear_tanh_k_kernel, rem=rem, nk=nk)
    return pl.pallas_call(
        kernel,
        out_shape=out_shape,
        grid_spec=pltpu.PrefetchScalarGridSpec(
            num_scalar_prefetch=0,
            grid=(ni, nj, nk),
            in_specs=[
                pl.BlockSpec((tm, tk), lambda i, j, k: (i, k)),
                pl.BlockSpec((tk, tn), lambda i, j, k: (k, j)),
                pl.BlockSpec((1, tn), lambda i, j, k: (0, j)),
            ],
            out_specs=pl.BlockSpec((tm, tn), lambda i, j, k: (i, j)),
            scratch_shapes=[pltpu.VMEM((tm, tn), jnp.float32)],
        ),
        compiler_params=pltpu.CompilerParams(
            dimension_semantics=("parallel", "parallel", "arbitrary"),
            vmem_limit_bytes=vmem_limit,
        ),
    )(x2, w_t, b2)


# --------------------------------------------------------------------------
# Init (matches nn.Linear defaults) + demo
# --------------------------------------------------------------------------
def init_linear_params(key, in_ch, out_ch, dtype=jnp.float32):
    """U(-1/sqrt(in_ch), 1/sqrt(in_ch)) for both weight and bias."""
    kw, kb = jax.random.split(key)
    bound = 1.0 / float(in_ch) ** 0.5
    weight = jax.random.uniform(kw, (out_ch, in_ch), dtype, -bound, bound)
    bias = jax.random.uniform(kb, (out_ch,), dtype, -bound, bound)
    return weight, bias


if __name__ == "__main__":
    in_ch, out_ch = 32, 64
    key = jax.random.PRNGKey(0)
    kx, kp = jax.random.split(key)

    # Batch of 2 samples x 8 vectors -> flattens to (16, in_ch).
    x = jax.random.normal(kx, (2, 8, in_ch), dtype=jnp.float32)
    weight, bias = init_linear_params(kp, in_ch, out_ch)

    # One-time prep (transpose + lane-dense padding), hoisted out of the call.
    w_t, b2 = prepare_linear_tanh_params(weight, bias)

    y = linear_tanh(x, w_t, b2, in_ch=in_ch, out_ch=out_ch)
    y = jax.block_until_ready(y)

    # Reference (same semantics as PyTorch Linear + Tanh).
    ref = jnp.tanh(x.reshape(-1, in_ch) @ weight.T + bias)
    assert y.shape == (16, out_ch), y.shape
    assert jnp.allclose(y, ref, atol=1e-5, rtol=1e-5), "mismatch vs reference"

    print("KERNEL_OK")
</pallas_src>

<mosaic_0001>
module attributes {stable_mosaic.version = 11 : i64} {
  func.func @_linear_tanh_kernel(%arg0: i32, %arg1: i32, %arg2: memref<8x32xf32, #tpu.memory_space<vmem>>, %arg3: memref<32x128xf32, #tpu.memory_space<vmem>>, %arg4: memref<1x128xf32, #tpu.memory_space<vmem>>, %arg5: memref<8x128xf32, #tpu.memory_space<vmem>>) attributes {dimension_semantics = [#tpu.dimension_semantics<parallel>, #tpu.dimension_semantics<parallel>], iteration_bounds = array<i64: 1, 2>, scalar_prefetch = 0 : i64, scratch_operands = 0 : i64, tpu.core_type = #tpu.core_type<tc>, window_params = [{transform_indices = @transform_0, window_bounds = array<i64: 8, 32>}, {transform_indices = @transform_1, window_bounds = array<i64: 32, 128>}, {transform_indices = @transform_2, window_bounds = array<i64: 1, 128>}, {transform_indices = @transform_3, window_bounds = array<i64: 8, 128>}]} {
    %c0 = arith.constant 0 : index
    %c0_0 = arith.constant 0 : index
    %0 = vector.load %arg2[%c0, %c0_0] : memref<8x32xf32, #tpu.memory_space<vmem>>, vector<8x32xf32>
    %c0_1 = arith.constant 0 : index
    %c0_2 = arith.constant 0 : index
    %1 = vector.load %arg3[%c0_1, %c0_2] : memref<32x128xf32, #tpu.memory_space<vmem>>, vector<32x128xf32>
    %cst = arith.constant dense<0.000000e+00> : vector<8x128xf32>
    %2 = tpu.matmul %0, %1, %cst {dimension_numbers = #tpu.dot_dimension_numbers<[1], [0], [0], [1], [0, 0, 1, 1], [], []>} : vector<8x32xf32>, vector<32x128xf32>, vector<8x128xf32> -> vector<8x128xf32>
    %c0_3 = arith.constant 0 : index
    %c0_4 = arith.constant 0 : index
    %3 = vector.load %arg4[%c0_3, %c0_4] : memref<1x128xf32, #tpu.memory_space<vmem>>, vector<1x128xf32>
    %4 = vector.broadcast %3 : vector<1x128xf32> to vector<8x128xf32>
    %5 = arith.addf %2, %4 : vector<8x128xf32>
    %6 = math.tanh %5 : vector<8x128xf32>
    %c0_5 = arith.constant 0 : index
    %c0_6 = arith.constant 0 : index
    %7 = vector.load %arg5[%c0_5, %c0_6] : memref<8x128xf32, #tpu.memory_space<vmem>>, vector<8x128xf32>
    tpu.vector_store %arg5[%c0_5, %c0_6], %6 {strides = array<i32>} : memref<8x128xf32, #tpu.memory_space<vmem>>, vector<8x128xf32>,
    return
  }
  func.func @transform_0(%arg0: i32, %arg1: i32) -> (i32, i32) {
    %c0_i32 = arith.constant 0 : i32
    %c0_i32_0 = arith.constant 0 : i32
    return %arg1, %c0_i32 : i32, i32
  }
  func.func @transform_1(%arg0: i32, %arg1: i32) -> (i32, i32) {
    %c0_i32 = arith.constant 0 : i32
    %c0_i32_0 = arith.constant 0 : i32
    return %c0_i32, %arg0 : i32, i32
  }
  func.func @transform_2(%arg0: i32, %arg1: i32) -> (i32, i32) {
    %c0_i32 = arith.constant 0 : i32
    %c0_i32_0 = arith.constant 0 : i32
    return %c0_i32, %arg0 : i32, i32
  }
  func.func @transform_3(%arg0: i32, %arg1: i32) -> (i32, i32) {
    %c0_i32 = arith.constant 0 : i32
    return %arg1, %arg0 : i32, i32
  }
}

</mosaic_0001>

<llo_original>
// kernel: linear_tanh.1
$region0: #{linear_tanh.1}
  #allocation0 [shape = 'u32[]', space=smem, size = 0x4, offset = 0x4, fixed_abs, tag = 'smem constant byte address 0x4 - core index']
  #allocation1 [shape = 'u32[144,128]{1,0:T(1,128)}', space=vmem, size = 0x12000, scoped, tag = 'internal scratch']
  %s0 = inlined_call_operand.hbm [shape: f32[16,32], index: 0, kind: input, shape index: {}]
  %s1 = inlined_call_operand.hbm [shape: f32[32,128], index: 1, kind: input, shape index: {}]
  %s2 = inlined_call_operand.vmem [shape: f32[1,128], index: 2, kind: input, shape index: {}]
  %s3 = inlined_call_operand.hbm [shape: f32[16,64], index: 3, kind: output, shape index: {}]
  %s4 = sld [smem:[#allocation0]]
  $region53: #{linear_tanh.1} parent=0
    _
  %s6 = ssub.s32 1, %s4
  %s7 = scalar_select 0, %s6, %s4
  $region1: #{linear_tanh.1} parent=0
    #allocation2 [shape = 'u8[8192]{0}', space=vmem, size = 0x2000, scoped, tag = 'input window, operand 0']
    #allocation3 [shape = 's32[2]{0}', space=sflag, size = 0x8, scoped, tag = 'scoped memory for linear_tanh.1']
    #allocation4 [shape = 's32[2]{0}', space=sflag, size = 0x8, scoped, tag = 'scoped memory for linear_tanh.1']
    #allocation5 [shape = 'u8[16384]{0}', space=vmem, size = 0x4000, scoped, tag = 'input window, operand 1, single buffered']
    #allocation6 [shape = 's32[1]{0}', space=sflag, size = 0x4, scoped, tag = 'scoped memory for linear_tanh.1']
    #allocation7 [shape = 'u8[8192]{0}', space=vmem, size = 0x2000, scoped, tag = 'output window, operand 0']
    %8 = vsyncpa [#allocation3], 0
    %s9 = scalar_lea.sflag [#allocation3], 1
    %10 = vsyncpa %s9, 0
    %11 = vsyncpa [#allocation6], 0
    %12 = vsyncpa [#allocation4], 0
    %s13 = scalar_lea.sflag [#allocation4], 1
    %14 = vsyncpa %s13, 0
    loop: start=0, step=1, limit=4
    $region2: #{linear_tanh.1} parent=1 // loop_pre_header
      _
    $region3: #{linear_tanh.1} parent=1 // loop_header
      %s16 = sphi 0, %s20
      %p17 = scmp.ge.s32.totalorder %s16, 4
      %s23 = sphi 0, %s35
      %s24 = sphi 0, %s31
      %s25 = sphi 0, %s23
      %s26 = sphi 0, %s24
      %s27 = sphi 0, %s25
      %s28 = sphi 0, %s26
      %s38 = sphi 0, %s40
      %s41 = sphi 0, %s38
      %s42 = sphi 0, %s41
      %s58 = sphi 0, %s42
      %s64 = sphi 0, %s66
      %s67 = sphi 0, %s64
      %s68 = sphi 0, %s67
      %s84 = sphi 0, %s68
      %s90 = sphi 0, %s92
      %s93 = sphi 0, %s90
      %s94 = sphi 0, %s93
      %s110 = sphi 0, %s94
      %s118 = sphi 0, %s120
      %s121 = sphi 0, %s118
      %s122 = sphi 0, %s121
      %s138 = sphi 0, %s122
    $region4: #{linear_tanh.1} parent=1 // loop_header_branch
      %19 = sbr.rel (%p17) target = $region8
    $region5: #{linear_tanh.1} parent=1 // loop_body
      %s21 = ssub.s32 %s16, 1
      %s22 = ssub.s32 %s16, 2
      %s29 = sadd.s32 1, %s24
      %p30 = scmp.ge.s32.totalorder %s29, 2
      %s31 = scalar_select %p30, 0, %s29
      %s32 = sadd.s32 1, %s23
      %s33 = scalar_select %p30, %s32, %s23
      %p34 = scmp.ge.s32.totalorder %s33, 1
      %s35 = scalar_select %p34, 0, %s33
      %s36 = ssub.s32 %s24, %s31
      %p37 = scmp.eq.s32.totalorder %s36, 0
      %s39 = sadd.s32 %s38, 1
      %s40 = scalar_select %p37, %s38, %s39
      %p43 = pneg %p37
      %p44 = scmp.eq.s32.totalorder %s16, 1
      %p45 = por %p43, %p44
      %p46 = scmp.ne.s32.totalorder %s38, %s41
      %p47 = scmp.eq.s32.totalorder %s16, 0
      %p48 = por %p46, %p47
      %p49 = scmp.ne.s32.totalorder %s38, %s41
      %p50 = scmp.eq.s32.totalorder %s21, 1
      %p51 = por %p49, %p50
      %p52 = scmp.ne.s32.totalorder %s41, %s42
      %p53 = scmp.eq.s32.totalorder %s21, 0
      %p54 = por %p52, %p53
      %p55 = scmp.ne.s32.totalorder %s41, %s42
      %p56 = scmp.eq.s32.totalorder %s22, 1
      %p57 = por %p55, %p56
      %p59 = scmp.ne.s32.totalorder %s42, %s58
      %p60 = scmp.eq.s32.totalorder %s22, 0
      %p61 = por %p59, %p60
      %s62 = ssub.s32 %s23, %s35
      %p63 = scmp.eq.s32.totalorder %s62, 0
      %s65 = sadd.s32 %s64, 1
      %s66 = scalar_select %p63, %s64, %s65
      %p69 = pneg %p63
      %p70 = scmp.eq.s32.totalorder %s16, 1
      %p71 = por %p69, %p70
      %p72 = scmp.ne.s32.totalorder %s64, %s67
      %p73 = scmp.eq.s32.totalorder %s16, 0
      %p74 = por %p72, %p73
      %p75 = scmp.ne.s32.totalorder %s64, %s67
      %p76 = scmp.eq.s32.totalorder %s21, 1
      %p77 = por %p75, %p76
      %p78 = scmp.ne.s32.totalorder %s67, %s68
      %p79 = scmp.eq.s32.totalorder %s21, 0
      %p80 = por %p78, %p79
      %p81 = scmp.ne.s32.totalorder %s67, %s68
      %p82 = scmp.eq.s32.totalorder %s22, 1
      %p83 = por %p81, %p82
      %p85 = scmp.ne.s32.totalorder %s68, %s84
      %p86 = scmp.eq.s32.totalorder %s22, 0
      %p87 = por %p85, %p86
      %s88 = ssub.s32 %s23, %s35
      %p89 = scmp.eq.s32.totalorder %s88, 0
      %s91 = sadd.s32 %s90, 1
      %s92 = scalar_select %p89, %s90, %s91
      %p95 = pneg %p89
      %p96 = scmp.eq.s32.totalorder %s16, 1
      %p97 = por %p95, %p96
      %p98 = scmp.ne.s32.totalorder %s90, %s93
      %p99 = scmp.eq.s32.totalorder %s16, 0
      %p100 = por %p98, %p99
      %p101 = scmp.ne.s32.totalorder %s90, %s93
      %p102 = scmp.eq.s32.totalorder %s21, 1
      %p103 = por %p101, %p102
      %p104 = scmp.ne.s32.totalorder %s93, %s94
      %p105 = scmp.eq.s32.totalorder %s21, 0
      %p106 = por %p104, %p105
      %p107 = scmp.ne.s32.totalorder %s93, %s94
      %p108 = scmp.eq.s32.totalorder %s22, 1
      %p109 = por %p107, %p108
      %p111 = scmp.ne.s32.totalorder %s94, %s110
      %p112 = scmp.eq.s32.totalorder %s22, 0
      %p113 = por %p111, %p112
      %s114 = ssub.s32 %s24, %s31
      %s115 = ssub.s32 %s23, %s35
      %s116 = sor.u32 %s114, %s115
      %p117 = scmp.eq.s32.totalorder %s116, 0
      %s119 = sadd.s32 %s118, 1
      %s120 = scalar_select %p117, %s118, %s119
      %p123 = pneg %p117
      %p124 = scmp.eq.s32.totalorder %s16, 1
      %p125 = por %p123, %p124
      %p126 = scmp.ne.s32.totalorder %s118, %s121
      %p127 = scmp.eq.s32.totalorder %s16, 0
      %p128 = por %p126, %p127
      %p129 = scmp.ne.s32.totalorder %s118, %s121
      %p130 = scmp.eq.s32.totalorder %s21, 1
      %p131 = por %p129, %p130
      %p132 = scmp.ne.s32.totalorder %s121, %s122
      %p133 = scmp.eq.s32.totalorder %s21, 0
      %p134 = por %p132, %p133
      %p135 = scmp.ne.s32.totalorder %s121, %s122
      %p136 = scmp.eq.s32.totalorder %s22, 1
      %p137 = por %p135, %p136
      %p139 = scmp.ne.s32.totalorder %s122, %s138
      %p140 = scmp.eq.s32.totalorder %s22, 0
      %p141 = por %p139, %p140
      %p142 = scmp.le.s32.totalorder 1, %s16
      %p143 = scmp.lt.s32.totalorder %s16, 3
      %p144 = pnand %p142, %p143
      %p145 = pneg %p144
      // Predicated region
      $region9: #{linear_tanh.1} parent=5 // pred_check
        _
      $region10: #{linear_tanh.1} parent=5 // pred_check_branch
        %147 = sbr.rel (%p144) target = $region12
      $region11: #{linear_tanh.1} parent=5 // pred_region
        %s148 = ssub.s32 %s16, 1
        // Predicated region
        $region13: #{linear_tanh.1} parent=11 // pred_check
          %p149 = pneg %p80
        $region14: #{linear_tanh.1} parent=11 // pred_check_branch
          %151 = sbr.rel (%p149) target = $region16
        $region15: #{linear_tanh.1} parent=11 // pred_region
          %s153 = ssub.s32 512, 512
          %154 = vsyncadd [#allocation6], %s153
          %s155 = smul.addr %s25, 128
          %s156 = scalar_lea.hbm %s1, %s155
          %s157 = sshll.u32 [#allocation5], 4
          %s158 = int_to_ptr.vmem [resolvable:$true] %s157
          %163 = dma.hbm_to_vmem [thread:$0]  %s156, 512, %s158, [#allocation6], 128, 128, 8
        $region16: #{linear_tanh.1} parent=11 // pred_fallthru
          _
        // Predicated region
        $region17: #{linear_tanh.1} parent=11 // pred_check
          %p164 = pneg %p106
        $region18: #{linear_tanh.1} parent=11 // pred_check_branch
          %166 = sbr.rel (%p164) target = $region20
        $region19: #{linear_tanh.1} parent=11 // pred_region
          %p167 = scmp.lt.s32.totalorder %s25, 0
          %s168 = scalar_select %p167, %s25, 0
          %s169 = scalar_lea.vmem %s2, %s168
        $region20: #{linear_tanh.1} parent=11 // pred_fallthru
          _
      $region12: #{linear_tanh.1} parent=5 // pred_fallthru
        _
      %p170 = scmp.lt.s32.totalorder %s16, 2
      // Predicated region
      $region21: #{linear_tanh.1} parent=5 // pred_check
        %p171 = pneg %p170
      $region22: #{linear_tanh.1} parent=5 // pred_check_branch
        %173 = sbr.rel (%p171) target = $region24
      $region23: #{linear_tanh.1} parent=5 // pred_region
        // Predicated region
        $region25: #{linear_tanh.1} parent=23 // pred_check
          %p174 = pneg %p48
        $region26: #{linear_tanh.1} parent=23 // pred_check_branch
          %176 = sbr.rel (%p174) target = $region28
        $region27: #{linear_tanh.1} parent=23 // pred_region
          %s177 = sand.u32 %s38, 1
          %s178 = scalar_lea.sflag [#allocation3], %s177
          %s179 = sand.u32 %s38, 1
          %s180 = smul.addr %s179, 8
          %s181 = scalar_lea.vmem [#allocation2], %s180
          %s183 = ssub.s32 128, 128
          %184 = vsyncadd %s178, %s183
          %s185 = smul.addr %s24, 128
          %s186 = scalar_lea.hbm %s0, %s185
          %s188 = sshll.u32 %s181, 4
          %s189 = int_to_ptr.vmem [resolvable:$true] %s188
          %191 = dma.hbm_to_vmem [thread:$0]  %s186, 128, %s189, %s178
        $region28: #{linear_tanh.1} parent=23 // pred_fallthru
          _
      $region24: #{linear_tanh.1} parent=5 // pred_fallthru
        _
      %p192 = scmp.le.s32.totalorder 1, %s16
      %p193 = scmp.lt.s32.totalorder %s16, 3
      %p194 = pnand %p192, %p193
      %p195 = pneg %p194
      // Predicated region
      $region29: #{linear_tanh.1} parent=5 // pred_check
        _
      $region30: #{linear_tanh.1} parent=5 // pred_check_branch
        %197 = sbr.rel (%p194) target = $region32
      $region31: #{linear_tanh.1} parent=5 // pred_region
        %s198 = ssub.s32 %s16, 1
        %s199 = sand.u32 %s41, 1
        %s200 = scalar_lea.sflag [#allocation3], %s199
        %s201 = sand.u32 %s41, 1
        %s202 = smul.addr %s201, 8
        %s203 = scalar_lea.vmem [#allocation2], %s202
        // Predicated region
        $region33: #{linear_tanh.1} parent=31 // pred_check
          %p204 = pneg %p54
        $region34: #{linear_tanh.1} parent=31 // pred_check_branch
          %206 = sbr.rel (%p204) target = $region36
        $region35: #{linear_tanh.1} parent=31 // pred_region
          %207 = dma.done %s200, 128
        $region36: #{linear_tanh.1} parent=31 // pred_fallthru
          _
        // Predicated region
        $region37: #{linear_tanh.1} parent=31 // pred_check
          %p208 = pneg %p80
        $region38: #{linear_tanh.1} parent=31 // pred_check_branch
          %210 = sbr.rel (%p208) target = $region40
        $region39: #{linear_tanh.1} parent=31 // pred_region
          %211 = dma.done [#allocation6], 512
        $region40: #{linear_tanh.1} parent=31 // pred_fallthru
          _
        %s212 = sand.u32 %s41, 1
        %s213 = scalar_lea.sflag [#allocation3], %s212
        %s214 = sand.u32 %s41, 1
        %s215 = smul.addr %s214, 8
        %s216 = scalar_lea.vmem [#allocation2], %s215
        %p217 = pneg %p54
        %p218 = pneg %p51
        %p219 = pneg %p80
        %p220 = pneg %p77
        %p221 = scmp.lt.s32.totalorder %s25, 0
        %s222 = scalar_select %p221, %s25, 0
        %s223 = scalar_lea.vmem %s2, %s222
        %p224 = pneg %p106
        %p225 = pneg %p103
        %p226 = pneg %p134
        %p227 = pneg %p131
        %s228 = sand.u32 %s121, 1
        %s229 = scalar_lea.sflag [#allocation4], %s228
        %s230 = sand.u32 %s121, 1
        %s231 = smul.addr %s230, 8
        %s232 = scalar_lea.vmem [#allocation7], %s231
        %p233 = scmp.lt.s32.totalorder %s25, 0
        %s234 = scalar_select %p233, %s25, 0
        %s235 = scalar_lea.vmem %s2, %s234
        %v236 = vld [vmem:[%s203] sm:$0xff]
        %v237 = vld [vmem:[#allocation5] sm:$0xff]
        %v238 = vld [vmem:[#allocation5 + $0x8] sm:$0xff]
        %v239 = vld [vmem:[#allocation5 + $0x10] sm:$0xff]
        %v240 = vld [vmem:[#allocation5 + $0x18] sm:$0xff]
        %v241 = vld [vmem:[%s235] sm:$0x1]
        %v243 = vlaneseq
        %v244 = vshrl.u32 %v243, 7
        %v245 = vsub.s32 0, %v244
        %v246 = vrot.slane %v241, %v245
        %vm248 = vcmask 261120
        %v250 = vsel %vm248, %v236, 0
        %252 = vmatprep.subr.mxu0 0.0
        %253 = vmatpush1.msra.mxu0 %v237
        %254 = vmatprep.subr.mxu0 0.0
        %255 = vmatpush1.msra.mxu0 %v238
        %256 = vmatprep.subr.mxu0 0.0
        %257 = vmatpush1.msra.mxu0 %v239
        %258 = vmatprep.subr.mxu0 0.0
        %259 = vmatpush1.msra.mxu0 %v240
        %260 = vmatprep.subr.mxu0 0.0
        %261 = vmatpush1.msra.mxu0 0.0
        %262 = vmatprep.subr.mxu0 0.0
        %263 = vmatpush1.msra.mxu0 0.0
        %264 = vmatprep.subr.mxu0 0.0
        %265 = vmatpush1.msra.mxu0 0.0
        %266 = vmatprep.subr.mxu0 0.0
        %267 = vmatpush1.msra.mxu0 0.0
        %268 = vmatprep.subr.mxu0 0.0
        %269 = vmatpush1.msra.mxu0 0.0
        %270 = vmatprep.subr.mxu0 0.0
        %271 = vmatpush1.msra.mxu0 0.0
        %272 = vmatprep.subr.mxu0 0.0
        %273 = vmatpush1.msra.mxu0 0.0
        %274 = vmatprep.subr.mxu0 0.0
        %275 = vmatpush1.msra.mxu0 0.0
        %276 = vmatprep.subr.mxu0 0.0
        %277 = vmatpush1.msra.mxu0 0.0
        %278 = vmatprep.subr.mxu0 0.0
        %279 = vmatpush1.msra.mxu0 0.0
        %280 = vmatprep.subr.mxu0 0.0
        %281 = vmatpush1.msra.mxu0 0.0
        %282 = vmatprep.subr.mxu0 0.0
        %283 = vmatpush1.msra.mxu0 0.0
        %284 = vmatprep.subr.mxu0 0.0
        %285 = vmatpush1.msra.mxu0 0.0
        %286 = vmatprep.subr.mxu0 0.0
        %287 = vmatpush1.msra.mxu0 0.0
        %288 = vmatprep.subr.mxu0 0.0
        %289 = vmatpush1.msra.mxu0 0.0
        %290 = vmatprep.subr.mxu0 0.0
        %291 = vmatpush1.msra.mxu0 0.0
        %292 = vmatprep.subr.mxu0 0.0
        %293 = vmatpush1.msra.mxu0 0.0
        %294 = vmatprep.subr.mxu0 0.0
        %295 = vmatpush1.msra.mxu0 0.0
        %296 = vmatprep.subr.mxu0 0.0
        %297 = vmatpush1.msra.mxu0 0.0
        %298 = vmatprep.subr.mxu0 0.0
        %299 = vmatpush1.msra.mxu0 0.0
        %300 = vmatprep.subr.mxu0 0.0
        %301 = vmatpush1.msra.mxu0 0.0
        %302 = vmatprep.subr.mxu0 0.0
        %303 = vmatpush1.msra.mxu0 0.0
        %304 = vmatprep.subr.mxu0 0.0
        %305 = vmatpush1.msra.mxu0 0.0
        %306 = vmatprep.subr.mxu0 0.0
        %307 = vmatpush1.msra.mxu0 0.0
        %308 = vmatprep.subr.mxu0 0.0
        %309 = vmatpush1.msra.mxu0 0.0
        %310 = vmatprep.subr.mxu0 0.0
        %311 = vmatpush1.msra.mxu0 0.0
        %312 = vmatprep.subr.mxu0 0.0
        %313 = vmatpush1.msra.mxu0 0.0
        %314 = vmatprep.subr.mxu0 0.0
        %315 = vmatpush1.msra.mxu0 0.0
        %316 = vmatprep.mubr.f32.mxu0 0.0
        %317 = vmatmul.mubr.f32.gmra.mrb[0].mxu0 %v250
        %v318 = vpop.f32.mrb[0].mxu0
        %v319 = vadd.f32 %v246, %v318
        %v320 = vpop.f32.mrb[0].mxu0
        %321 = vdwg.mxu0
        %v322 = vtanh.pop %v319
        %323 = vst [vmem:[%s232] sm:$0xff] %v322
        %s324 = sand.u32 %s121, 1
        %s325 = scalar_lea.sflag [#allocation4], %s324
        %s326 = sand.u32 %s121, 1
        %s327 = smul.addr %s326, 8
        %s328 = scalar_lea.vmem [#allocation7], %s327
        // Predicated region
        $region41: #{linear_tanh.1} parent=31 // pred_check
          %p329 = pneg %p131
        $region42: #{linear_tanh.1} parent=31 // pred_check_branch
          %331 = sbr.rel (%p329) target = $region44
        $region43: #{linear_tanh.1} parent=31 // pred_region
          %s333 = ssub.s32 128, 128
          %334 = vsyncadd %s325, %s333
          %s335 = sadd.s32 %s25, %s26
          %s336 = smul.addr %s335, 128
          %s337 = scalar_lea.hbm %s3, %s336
          %s339 = sshll.u32 %s328, 4
          %s340 = int_to_ptr.vmem [resolvable:$true] %s339
          %342 = dma.vmem_to_hbm [thread:$0]  %s340, 128, %s337, %s325
        $region44: #{linear_tanh.1} parent=31 // pred_fallthru
          _
      $region32: #{linear_tanh.1} parent=5 // pred_fallthru
        _
      %p343 = scmp.le.s32.totalorder 2, %s16
      // Predicated region
      $region45: #{linear_tanh.1} parent=5 // pred_check
        %p344 = pneg %p343
      $region46: #{linear_tanh.1} parent=5 // pred_check_branch
        %346 = sbr.rel (%p344) target = $region48
      $region47: #{linear_tanh.1} parent=5 // pred_region
        %s347 = ssub.s32 %s16, 2
        // Predicated region
        $region49: #{linear_tanh.1} parent=47 // pred_check
          %p348 = pneg %p137
        $region50: #{linear_tanh.1} parent=47 // pred_check_branch
          %350 = sbr.rel (%p348) target = $region52
        $region51: #{linear_tanh.1} parent=47 // pred_region
          %s351 = sand.u32 %s122, 1
          %s352 = scalar_lea.sflag [#allocation4], %s351
          %s353 = sand.u32 %s122, 1
          %s354 = smul.addr %s353, 8
          %s355 = scalar_lea.vmem [#allocation7], %s354
          %356 = dma.done %s352, 128
        $region52: #{linear_tanh.1} parent=47 // pred_fallthru
          _
      $region48: #{linear_tanh.1} parent=5 // pred_fallthru
        _
    $region6: #{linear_tanh.1} parent=1 // loop_footer
      %s20 = sadd.s32 1, %s16
    $region7: #{linear_tanh.1} parent=1 // loop_footer_branch
      %15 = sbr.rel target = $region3
    $region8: #{linear_tanh.1} parent=1 // loop_exit
      _
    %357 = vsyncpa [#allocation3], 1
    %s358 = scalar_lea.sflag [#allocation3], 1
    %359 = vsyncpa %s358, 1
    %360 = vsyncpa [#allocation6], 1
    %361 = vsyncpa [#allocation4], 1
    %s362 = scalar_lea.sflag [#allocation4], 1
    %363 = vsyncpa %s362, 1

</llo_original>
